<compile_context>
chip_gen: v6e
topology: v6e:2x2x1
jax: 0.10.0
libtpu: 0.0.40
codegen_flags: <defaults>
</compile_context>

<pallas_src>
import functools
import math

import jax
import jax.numpy as jnp
from jax.experimental import pallas as pl
from jax.experimental.pallas import tpu as pltpu


def _round_up(a, b):
    return -(-a // b) * b


def _pwm_conv1d_kernel(x_ref, w_ref, o_ref, *scratch, k_size, c_in, tile, halo):
    """One (batch, L-chunk, C_out-tile, L-tile) grid step.

    x_ref : (1, 1, C_in, chunk + halo)   VMEM, resident per (batch, chunk)
    w_ref : (TILE_CO, K*C_in)            VMEM, lane-dense, resident per C_out tile
    o_ref : (1, TILE_CO, TILE_L)         VMEM, lane-dense (TILE_L % 128 == 0)
    scratch (optional): (K*C_in, TILE_L) VMEM im2col slab (small-C_in path only)
    """
    j = pl.program_id(3)
    start = pl.multiple_of(j * tile, 128)
    # Free VPU cast to the compute dtype (no-op when dtypes already match).
    xwin = x_ref[0, 0, :, pl.ds(start, tile + halo)].astype(w_ref.dtype)

    if scratch:
        # Small C_in: im2col into a VMEM slab -> one wide-contraction MXU matmul.
        # Row k*C_in + c of the slab holds x[c, t + k]; the weight rows match (k-major).
        (slab_ref,) = scratch
        for k in range(k_size):                              # short, static, unrolled
            slab_ref[k * c_in:(k + 1) * c_in, :] = xwin[:, k:k + tile]
        acc = jnp.dot(w_ref[...], slab_ref[...], preferred_element_type=jnp.float32)
    else:
        # Large C_in (>= 128): contraction already MXU-wide; accumulate K dots instead
        # of building a slab (friendlier to v7x's in-place MRB accumulation).
        acc = jnp.dot(w_ref[:, 0:c_in], xwin[:, 0:tile],
                      preferred_element_type=jnp.float32)
        for k in range(1, k_size):
            acc = acc + jnp.dot(w_ref[:, k * c_in:(k + 1) * c_in],
                                xwin[:, k:k + tile],
                                preferred_element_type=jnp.float32)

    o_ref[0] = acc.astype(o_ref.dtype)                       # (TILE_CO, TILE_L)


def pwm_conv1d(x, weight, *, tile_l=None, tile_co=None, compute_dtype=None,
               out_dtype=None, max_resident_tiles=None):
    """Cross-correlation conv1d, padding=0, no bias (matches nn.Conv1d forward).

    x: (N, C_in, L), weight: (C_out, C_in, K) -> (N, C_out, L - K + 1).
    compute_dtype defaults to x.dtype (PyTorch f32 parity); pass jnp.bfloat16 for 2x MXU
    rate and half the VMEM.  out_dtype defaults to x.dtype (pass bf16 to halve writeback).
    """
    n, c_in, length = x.shape
    c_out, c_in_w, k_size = weight.shape
    assert c_in_w == c_in, "weight C_in mismatch"
    assert length >= k_size, "input shorter than kernel"
    l_out = length - k_size + 1

    compute_dtype = jnp.dtype(compute_dtype) if compute_dtype is not None else x.dtype
    out_dtype = jnp.dtype(out_dtype) if out_dtype is not None else x.dtype
    cbytes = jnp.dtype(compute_dtype).itemsize
    obytes = jnp.dtype(out_dtype).itemsize

    halo = k_size - 1
    cdim = k_size * c_in
    use_slab = c_in < 128      # im2col only pays off while the per-k contraction is narrow

    # Generation-aware VMEM budget (v5e/v6e: 128 MiB, v7x: 64 MiB per TC).
    try:
        vmem_cap = int(pltpu.get_tpu_info().vmem_capacity_bytes)
    except Exception:
        vmem_cap = 64 * 1024 * 1024                    # conservative fallback
    vmem_limit = int(vmem_cap * 0.85)
    plan_budget = int(vmem_cap * 0.70)                 # headroom for compiler scratch

    # C_out tile: sublane-aligned, bounded so the f32 accumulator stays small.
    if tile_co is None:
        tile_co = 256
    tile_co = max(8, _round_up(min(tile_co, _round_up(c_out, 8)), 8))

    # L tile: lane-dense (multiple of 128), as large as the budget allows.
    l_out_ceil = _round_up(l_out, 128)
    tile = min(_round_up(tile_l, 128) if tile_l is not None else 1024, l_out_ceil)
    tile = max(tile, 128)

    def vmem_use(tile_, chunk_, tco_):
        win_ = chunk_ + halo
        use = 2 * c_in * win_ * cbytes                 # x chunk block (double-buffered)
        use += 2 * tco_ * cdim * cbytes                # weight tile (double-buffered)
        use += 2 * tco_ * tile_ * obytes               # output tile (double-buffered)
        if use_slab:
            use += cdim * tile_ * cbytes               # im2col slab scratch
        use += tco_ * tile_ * 4                        # f32 matmul result
        use += 2 * c_in * (tile_ + halo) * cbytes      # xwin + shifted-slice temporaries
        return use

    # Shrink the L tile, then the C_out tile, until the minimal config fits.
    while tile > 128 and vmem_use(tile, tile, tile_co) > plan_budget:
        tile -= 128
    while tile_co > 8 and vmem_use(tile, tile, tile_co) > plan_budget:
        tile_co = max(8, _round_up(tile_co // 2, 8))
    if vmem_use(tile, tile, tile_co) > plan_budget:
        # TODO(synk): fall back to memory_space=pl.ANY + manual double-buffered halo DMA
        # per L-tile for pathological C_in*K; not needed for PWM-sized problems.
        raise ValueError("PWMConv1D: smallest tile does not fit the VMEM budget")

    # Grow the resident x chunk (in units of L tiles) as far as the budget allows.
    max_tiles = pl.cdiv(l_out, tile)
    tiles_per_chunk = max_tiles
    if max_resident_tiles is not None:
        tiles_per_chunk = max(1, min(tiles_per_chunk, int(max_resident_tiles)))
    while tiles_per_chunk > 1 and vmem_use(tile, tiles_per_chunk * tile, tile_co) > plan_budget:
        tiles_per_chunk -= 1

    chunk = tiles_per_chunk * tile
    num_l = tiles_per_chunk
    num_chunks = pl.cdiv(max_tiles, tiles_per_chunk)
    l_total = num_chunks * chunk
    win = chunk + halo

    c_out_pad = _round_up(c_out, tile_co)
    num_co = c_out_pad // tile_co

    # Pad (and cast) x once so every chunk window is in-bounds; the cast is fused into
    # the same pass.  TODO(synk): a clamped-tail variant with masked final stores would
    # avoid this extra pass over x entirely.
    pad_cols = l_total + halo - length
    xc = x
    if pad_cols > 0:
        xc = jnp.pad(xc, ((0, 0), (0, 0), (0, pad_cols)))
    if xc.dtype != compute_dtype:
        xc = xc.astype(compute_dtype)

    if num_chunks == 1:
        x4 = xc[:, None]                               # (N, 1, C_in, win) — free reshape
    else:
        # TODO(synk): a manual halo DMA (memory_space=pl.ANY) would avoid this extra copy.
        x4 = jnp.stack([xc[:, :, i * chunk:i * chunk + win] for i in range(num_chunks)],
                       axis=1)                         # (N, num_chunks, C_in, win)

    # Lane-dense weight: (C_out_pad, K*C_in), rows ordered k-major to match the slab.
    w2 = jnp.transpose(weight, (0, 2, 1)).reshape(c_out, cdim).astype(compute_dtype)
    if c_out_pad > c_out:
        w2 = jnp.pad(w2, ((0, c_out_pad - c_out), (0, 0)))

    kernel = functools.partial(_pwm_conv1d_kernel, k_size=k_size, c_in=c_in,
                               tile=tile, halo=halo)
    scratch_shapes = [pltpu.VMEM((cdim, tile), compute_dtype)] if use_slab else []

    y = pl.pallas_call(
        kernel,
        out_shape=jax.ShapeDtypeStruct((n, c_out_pad, l_total), out_dtype),
        grid_spec=pltpu.PrefetchScalarGridSpec(
            num_scalar_prefetch=0,
            grid=(n, num_chunks, num_co, num_l),
            in_specs=[
                # x chunk resident across the (co, j) sweeps: DMA'd once per (b, chunk).
                pl.BlockSpec((1, 1, c_in, win), lambda b, ch, co, j: (b, ch, 0, 0)),
                # Weight tile resident across the L sweep; re-fetched only when co changes.
                # TODO(synk): pipeline_mode=pl.Buffered(1) would halve its footprint.
                pl.BlockSpec((tile_co, cdim), lambda b, ch, co, j: (co, 0)),
            ],
            out_specs=pl.BlockSpec((1, tile_co, tile),
                                   lambda b, ch, co, j: (b, co, ch * num_l + j)),
            scratch_shapes=scratch_shapes,
        ),
        compiler_params=pltpu.CompilerParams(
            # No cross-step state -> every axis is safe to shard across TensorCores.
            dimension_semantics=("parallel", "parallel", "parallel", "parallel"),
            vmem_limit_bytes=vmem_limit,
        ),
    )(x4, w2)

    return y[:, :c_out, :l_out]


def xavier_uniform_conv1d_weight(key, c_out, c_in, k_size, dtype=jnp.float32):
    # Matches torch.nn.init.xavier_uniform_ for a Conv1d weight:
    # fan_in = c_in * k, fan_out = c_out * k, bound = sqrt(6 / (fan_in + fan_out)).
    fan_in = c_in * k_size
    fan_out = c_out * k_size
    bound = math.sqrt(6.0 / (fan_in + fan_out))
    return jax.random.uniform(key, (c_out, c_in, k_size), dtype=dtype,
                              minval=-bound, maxval=bound)


def _conv1d_ref(x, weight):
    # Plain-JAX cross-correlation reference (PyTorch conv semantics), f32.
    c_out, c_in, k_size = weight.shape
    l_out = x.shape[-1] - k_size + 1
    y = jnp.zeros((x.shape[0], c_out, l_out), jnp.float32)
    for k in range(k_size):
        y = y + jnp.einsum("oc,bcl->bol",
                           weight[:, :, k].astype(jnp.float32),
                           x[:, :, k:k + l_out].astype(jnp.float32))
    return y


if __name__ == "__main__":
    key = jax.random.PRNGKey(0)
    k1, k2, k3, k4, k5, k6 = jax.random.split(key, 6)

    # 1) PWMConv1D-sized case, default f32 parity path (xavier-initialized weights).
    x = jax.random.normal(k1, (2, 4, 16), dtype=jnp.float32)
    w = xavier_uniform_conv1d_weight(k2, 8, 4, 3)
    y = jax.block_until_ready(pwm_conv1d(x, w))
    assert y.shape == (2, 8, 14)
    assert jnp.allclose(y, _conv1d_ref(x, w), atol=1e-3, rtol=1e-3)

    # Integer-valued inputs make the remaining checks exact regardless of MXU precision.
    def int_inputs(kx, kw, n, ci, L, co, K):
        xi = jax.random.randint(kx, (n, ci, L), -3, 4).astype(jnp.float32)
        wi = jax.random.randint(kw, (co, ci, K), -2, 3).astype(jnp.float32)
        return xi, wi

    # 2) bf16-compute / f32-accumulate path.
    xi, wi = int_inputs(k3, k4, 2, 4, 16, 8, 3)
    y = jax.block_until_ready(pwm_conv1d(xi, wi, compute_dtype=jnp.bfloat16))
    assert jnp.allclose(y, _conv1d_ref(xi, wi), atol=1e-6)

    # 3) Chunked-x path (bounded VMEM residency along L).
    xi, wi = int_inputs(k5, k6, 2, 4, 300, 8, 3)
    y = jax.block_until_ready(pwm_conv1d(xi, wi, tile_l=128, max_resident_tiles=1))
    assert y.shape == (2, 8, 298)
    assert jnp.allclose(y, _conv1d_ref(xi, wi), atol=1e-6)

    # 4) Wide-C_in path (K accumulated MXU dots, no im2col slab).
    xi, wi = int_inputs(k1, k2, 1, 128, 200, 16, 3)
    y = jax.block_until_ready(pwm_conv1d(xi, wi))
    assert y.shape == (1, 16, 198)
    assert jnp.allclose(y, _conv1d_ref(xi, wi), atol=1e-6)

    print("KERNEL_OK")
</pallas_src>

<mosaic_0001>
module attributes {stable_mosaic.version = 11 : i64} {
  func.func @_pwm_conv1d_kernel(%arg0: i32, %arg1: i32, %arg2: i32, %arg3: i32, %arg4: memref<1x1x4x130xf32, #tpu.memory_space<vmem>>, %arg5: memref<8x12xf32, #tpu.memory_space<vmem>>, %arg6: memref<1x8x128xf32, #tpu.memory_space<vmem>>, %arg7: memref<12x128xf32, #tpu.memory_space<vmem>>) attributes {dimension_semantics = [#tpu.dimension_semantics<parallel>, #tpu.dimension_semantics<parallel>, #tpu.dimension_semantics<parallel>, #tpu.dimension_semantics<parallel>], iteration_bounds = array<i64: 2, 1, 1, 1>, scalar_prefetch = 0 : i64, scratch_operands = 1 : i64, tpu.core_type = #tpu.core_type<tc>, window_params = [{transform_indices = @transform_0, window_bounds = array<i64: 1, 1, 4, 130>}, {transform_indices = @transform_1, window_bounds = array<i64: 8, 12>}, {transform_indices = @transform_2, window_bounds = array<i64: 1, 8, 128>}]} {
    %c128_i32 = arith.constant 128 : i32
    %0 = arith.muli %arg3, %c128_i32 : i32
    %1 = tpu.assume_multiple %0, 128 : i32
    %c0 = arith.constant 0 : index
    %c0_0 = arith.constant 0 : index
    %c0_1 = arith.constant 0 : index
    %2 = arith.index_cast %1 : i32 to index
    %3 = vector.load %arg4[%c0, %c0_0, %c0_1, %2] : memref<1x1x4x130xf32, #tpu.memory_space<vmem>>, vector<1x1x4x130xf32>
    %4 = vector.shape_cast %3 : vector<1x1x4x130xf32> to vector<4x130xf32>
    %5 = vector.extract_strided_slice %4 {offsets = [0, 0], sizes = [4, 128], strides = [1, 1]} : vector<4x130xf32> to vector<4x128xf32>
    %c0_2 = arith.constant 0 : index
    %c0_3 = arith.constant 0 : index
    %6 = vector.load %arg7[%c0_2, %c0_3] : memref<12x128xf32, #tpu.memory_space<vmem>>, vector<4x128xf32>
    tpu.vector_store %arg7[%c0_2, %c0_3], %5 {strides = array<i32>} : memref<12x128xf32, #tpu.memory_space<vmem>>, vector<4x128xf32>,
    %7 = vector.extract_strided_slice %4 {offsets = [0, 1], sizes = [4, 128], strides = [1, 1]} : vector<4x130xf32> to vector<4x128xf32>
    %c4 = arith.constant 4 : index
    %c0_4 = arith.constant 0 : index
    %8 = vector.load %arg7[%c4, %c0_4] : memref<12x128xf32, #tpu.memory_space<vmem>>, vector<4x128xf32>
    tpu.vector_store %arg7[%c4, %c0_4], %7 {strides = array<i32>} : memref<12x128xf32, #tpu.memory_space<vmem>>, vector<4x128xf32>,
    %9 = vector.extract_strided_slice %4 {offsets = [0, 2], sizes = [4, 128], strides = [1, 1]} : vector<4x130xf32> to vector<4x128xf32>
    %c8 = arith.constant 8 : index
    %c0_5 = arith.constant 0 : index
    %10 = vector.load %arg7[%c8, %c0_5] : memref<12x128xf32, #tpu.memory_space<vmem>>, vector<4x128xf32>
    tpu.vector_store %arg7[%c8, %c0_5], %9 {strides = array<i32>} : memref<12x128xf32, #tpu.memory_space<vmem>>, vector<4x128xf32>,
    %c0_6 = arith.constant 0 : index
    %c0_7 = arith.constant 0 : index
    %11 = vector.load %arg5[%c0_6, %c0_7] : memref<8x12xf32, #tpu.memory_space<vmem>>, vector<8x12xf32>
    %c0_8 = arith.constant 0 : index
    %c0_9 = arith.constant 0 : index
    %12 = vector.load %arg7[%c0_8, %c0_9] : memref<12x128xf32, #tpu.memory_space<vmem>>, vector<12x128xf32>
    %cst = arith.constant dense<0.000000e+00> : vector<8x128xf32>
    %13 = tpu.matmul %11, %12, %cst {dimension_numbers = #tpu.dot_dimension_numbers<[1], [0], [0], [1], [0, 0, 1, 1], [], []>} : vector<8x12xf32>, vector<12x128xf32>, vector<8x128xf32> -> vector<8x128xf32>
    %c0_10 = arith.constant 0 : index
    %c0_11 = arith.constant 0 : index
    %c0_12 = arith.constant 0 : index
    %14 = vector.load %arg6[%c0_10, %c0_11, %c0_12] : memref<1x8x128xf32, #tpu.memory_space<vmem>>, vector<1x8x128xf32>
    %15 = vector.shape_cast %14 : vector<1x8x128xf32> to vector<8x128xf32>
    %16 = vector.shape_cast %13 : vector<8x128xf32> to vector<1x8x128xf32>
    tpu.vector_store %arg6[%c0_10, %c0_11, %c0_12], %16 {strides = array<i32>} : memref<1x8x128xf32, #tpu.memory_space<vmem>>, vector<1x8x128xf32>,
    return
  }
  func.func @transform_0(%arg0: i32, %arg1: i32, %arg2: i32, %arg3: i32) -> (i32, i32, i32, i32) {
    %c0_i32 = arith.constant 0 : i32
    %c0_i32_0 = arith.constant 0 : i32
    %c0_i32_1 = arith.constant 0 : i32
    return %arg0, %arg1, %c0_i32, %c0_i32_0 : i32, i32, i32, i32
  }
  func.func @transform_1(%arg0: i32, %arg1: i32, %arg2: i32, %arg3: i32) -> (i32, i32) {
    %c0_i32 = arith.constant 0 : i32
    %c0_i32_0 = arith.constant 0 : i32
    return %arg2, %c0_i32 : i32, i32
  }
  func.func @transform_2(%arg0: i32, %arg1: i32, %arg2: i32, %arg3: i32) -> (i32, i32, i32) {
    %c1_i32 = arith.constant 1 : i32
    %0 = arith.muli %arg1, %c1_i32 : i32
    %1 = arith.addi %0, %arg3 : i32
    %c0_i32 = arith.constant 0 : i32
    return %arg0, %arg2, %1 : i32, i32, i32
  }
}

</mosaic_0001>

<llo_original>
// kernel: tpu_custom_call.1
$region0: #{tpu_custom_call.1}
  #allocation0 [shape = 'u32[]', space=smem, size = 0x4, offset = 0x4, fixed_abs, tag = 'smem constant byte address 0x4 - core index']
  #allocation1 [shape = 'u32[144,128]{1,0:T(1,128)}', space=vmem, size = 0x12000, scoped, tag = 'internal scratch']
  #allocation2 [shape = 'f32[12,128]{1,0:T(8,128)}', space=vmem, size = 0x2000, scoped, tag = 'scratch operand']
  %s0 = inlined_call_operand.hbm [shape: f32[2,1,4,130], index: 0, kind: input, shape index: {}]
  %s1 = inlined_call_operand.hbm [shape: f32[8,12], index: 1, kind: input, shape index: {}]
  %s2 = inlined_call_operand.hbm [shape: f32[2,8,128], index: 2, kind: output, shape index: {}]
  %s3 = sld [smem:[#allocation0]]
  $region49: #{tpu_custom_call.1} parent=0
    _
  %s5 = ssub.s32 1, %s3
  %s6 = scalar_select 0, %s5, %s3
  $region1: #{tpu_custom_call.1} parent=0
    #allocation3 [shape = 'u8[8192]{0}', space=vmem, size = 0x2000, scoped, tag = 'input window, operand 0']
    #allocation4 [shape = 's32[2]{0}', space=sflag, size = 0x8, scoped, tag = 'scoped memory for tpu_custom_call.1']
    #allocation5 [shape = 's32[2]{0}', space=sflag, size = 0x8, scoped, tag = 'scoped memory for tpu_custom_call.1']
    #allocation6 [shape = 'u8[4096]{0}', space=vmem, size = 0x1000, scoped, tag = 'input window, operand 1, single buffered']
    #allocation7 [shape = 's32[1]{0}', space=sflag, size = 0x4, scoped, tag = 'scoped memory for tpu_custom_call.1']
    #allocation8 [shape = 'u8[8192]{0}', space=vmem, size = 0x2000, scoped, tag = 'output window, operand 0']
    %7 = vsyncpa [#allocation4], 0
    %s8 = scalar_lea.sflag [#allocation4], 1
    %9 = vsyncpa %s8, 0
    %10 = vsyncpa [#allocation7], 0
    %11 = vsyncpa [#allocation5], 0
    %s12 = scalar_lea.sflag [#allocation5], 1
    %13 = vsyncpa %s12, 0
    loop: start=0, step=1, limit=4
    $region2: #{tpu_custom_call.1} parent=1 // loop_pre_header
      _
    $region3: #{tpu_custom_call.1} parent=1 // loop_header
      %s15 = sphi 0, %s19
      %p16 = scmp.ge.s32.totalorder %s15, 4
      %s22 = sphi 0, %s48
      %s23 = sphi 0, %s44
      %s24 = sphi 0, %s40
      %s25 = sphi 0, %s36
      %s26 = sphi 0, %s22
      %s27 = sphi 0, %s23
      %s28 = sphi 0, %s24
      %s29 = sphi 0, %s25
      %s30 = sphi 0, %s26
      %s31 = sphi 0, %s27
      %s32 = sphi 0, %s28
      %s33 = sphi 0, %s29
      %s53 = sphi 0, %s55
      %s56 = sphi 0, %s53
      %s57 = sphi 0, %s56
      %s73 = sphi 0, %s57
      %s79 = sphi 0, %s81
      %s82 = sphi 0, %s79
      %s83 = sphi 0, %s82
      %s99 = sphi 0, %s83
      %s111 = sphi 0, %s113
      %s114 = sphi 0, %s111
      %s115 = sphi 0, %s114
      %s131 = sphi 0, %s115
    $region4: #{tpu_custom_call.1} parent=1 // loop_header_branch
      %18 = sbr.rel (%p16) target = $region8
    $region5: #{tpu_custom_call.1} parent=1 // loop_body
      %s20 = ssub.s32 %s15, 1
      %s21 = ssub.s32 %s15, 2
      %s34 = sadd.s32 1, %s25
      %p35 = scmp.ge.s32.totalorder %s34, 1
      %s36 = scalar_select %p35, 0, %s34
      %s37 = sadd.s32 1, %s24
      %s38 = scalar_select %p35, %s37, %s24
      %p39 = scmp.ge.s32.totalorder %s38, 1
      %s40 = scalar_select %p39, 0, %s38
      %s41 = sadd.s32 1, %s23
      %s42 = scalar_select %p39, %s41, %s23
      %p43 = scmp.ge.s32.totalorder %s42, 1
      %s44 = scalar_select %p43, 0, %s42
      %s45 = sadd.s32 1, %s22
      %s46 = scalar_select %p43, %s45, %s22
      %p47 = scmp.ge.s32.totalorder %s46, 2
      %s48 = scalar_select %p47, 0, %s46
      %s49 = ssub.s32 %s22, %s48
      %s50 = ssub.s32 %s23, %s44
      %s51 = sor.u32 %s49, %s50
      %p52 = scmp.eq.s32.totalorder %s51, 0
      %s54 = sadd.s32 %s53, 1
      %s55 = scalar_select %p52, %s53, %s54
      %p58 = pneg %p52
      %p59 = scmp.eq.s32.totalorder %s15, 1
      %p60 = por %p58, %p59
      %p61 = scmp.ne.s32.totalorder %s53, %s56
      %p62 = scmp.eq.s32.totalorder %s15, 0
      %p63 = por %p61, %p62
      %p64 = scmp.ne.s32.totalorder %s53, %s56
      %p65 = scmp.eq.s32.totalorder %s20, 1
      %p66 = por %p64, %p65
      %p67 = scmp.ne.s32.totalorder %s56, %s57
      %p68 = scmp.eq.s32.totalorder %s20, 0
      %p69 = por %p67, %p68
      %p70 = scmp.ne.s32.totalorder %s56, %s57
      %p71 = scmp.eq.s32.totalorder %s21, 1
      %p72 = por %p70, %p71
      %p74 = scmp.ne.s32.totalorder %s57, %s73
      %p75 = scmp.eq.s32.totalorder %s21, 0
      %p76 = por %p74, %p75
      %s77 = ssub.s32 %s24, %s40
      %p78 = scmp.eq.s32.totalorder %s77, 0
      %s80 = sadd.s32 %s79, 1
      %s81 = scalar_select %p78, %s79, %s80
      %p84 = pneg %p78
      %p85 = scmp.eq.s32.totalorder %s15, 1
      %p86 = por %p84, %p85
      %p87 = scmp.ne.s32.totalorder %s79, %s82
      %p88 = scmp.eq.s32.totalorder %s15, 0
      %p89 = por %p87, %p88
      %p90 = scmp.ne.s32.totalorder %s79, %s82
      %p91 = scmp.eq.s32.totalorder %s20, 1
      %p92 = por %p90, %p91
      %p93 = scmp.ne.s32.totalorder %s82, %s83
      %p94 = scmp.eq.s32.totalorder %s20, 0
      %p95 = por %p93, %p94
      %p96 = scmp.ne.s32.totalorder %s82, %s83
      %p97 = scmp.eq.s32.totalorder %s21, 1
      %p98 = por %p96, %p97
      %p100 = scmp.ne.s32.totalorder %s83, %s99
      %p101 = scmp.eq.s32.totalorder %s21, 0
      %p102 = por %p100, %p101
      %s103 = sadd.s32 %s23, %s25
      %s104 = sadd.s32 %s44, %s36
      %s105 = ssub.s32 %s22, %s48
      %s106 = ssub.s32 %s24, %s40
      %s107 = sor.u32 %s105, %s106
      %s108 = ssub.s32 %s103, %s104
      %s109 = sor.u32 %s107, %s108
      %p110 = scmp.eq.s32.totalorder %s109, 0
      %s112 = sadd.s32 %s111, 1
      %s113 = scalar_select %p110, %s111, %s112
      %p116 = pneg %p110
      %p117 = scmp.eq.s32.totalorder %s15, 1
      %p118 = por %p116, %p117
      %p119 = scmp.ne.s32.totalorder %s111, %s114
      %p120 = scmp.eq.s32.totalorder %s15, 0
      %p121 = por %p119, %p120
      %p122 = scmp.ne.s32.totalorder %s111, %s114
      %p123 = scmp.eq.s32.totalorder %s20, 1
      %p124 = por %p122, %p123
      %p125 = scmp.ne.s32.totalorder %s114, %s115
      %p126 = scmp.eq.s32.totalorder %s20, 0
      %p127 = por %p125, %p126
      %p128 = scmp.ne.s32.totalorder %s114, %s115
      %p129 = scmp.eq.s32.totalorder %s21, 1
      %p130 = por %p128, %p129
      %p132 = scmp.ne.s32.totalorder %s115, %s131
      %p133 = scmp.eq.s32.totalorder %s21, 0
      %p134 = por %p132, %p133
      %p135 = scmp.le.s32.totalorder 1, %s15
      %p136 = scmp.lt.s32.totalorder %s15, 3
      %p137 = pnand %p135, %p136
      %p138 = pneg %p137
      // Predicated region
      $region9: #{tpu_custom_call.1} parent=5 // pred_check
        _
      $region10: #{tpu_custom_call.1} parent=5 // pred_check_branch
        %140 = sbr.rel (%p137) target = $region12
      $region11: #{tpu_custom_call.1} parent=5 // pred_region
        %s141 = ssub.s32 %s15, 1
        // Predicated region
        $region13: #{tpu_custom_call.1} parent=11 // pred_check
          %p142 = pneg %p95
        $region14: #{tpu_custom_call.1} parent=11 // pred_check_branch
          %144 = sbr.rel (%p142) target = $region16
        $region15: #{tpu_custom_call.1} parent=11 // pred_region
          %s146 = ssub.s32 128, 128
          %147 = vsyncadd [#allocation7], %s146
          %s148 = smul.addr %s28, 128
          %s149 = scalar_lea.hbm %s1, %s148
          %s151 = sshll.u32 [#allocation6], 4
          %s152 = int_to_ptr.vmem [resolvable:$true] %s151
          %154 = dma.hbm_to_vmem [thread:$0]  %s149, 128, %s152, [#allocation7]
        $region16: #{tpu_custom_call.1} parent=11 // pred_fallthru
          _
      $region12: #{tpu_custom_call.1} parent=5 // pred_fallthru
        _
      %p155 = scmp.lt.s32.totalorder %s15, 2
      // Predicated region
      $region17: #{tpu_custom_call.1} parent=5 // pred_check
        %p156 = pneg %p155
      $region18: #{tpu_custom_call.1} parent=5 // pred_check_branch
        %158 = sbr.rel (%p156) target = $region20
      $region19: #{tpu_custom_call.1} parent=5 // pred_region
        // Predicated region
        $region21: #{tpu_custom_call.1} parent=19 // pred_check
          %p159 = pneg %p63
        $region22: #{tpu_custom_call.1} parent=19 // pred_check_branch
          %161 = sbr.rel (%p159) target = $region24
        $region23: #{tpu_custom_call.1} parent=19 // pred_region
          %s162 = sand.u32 %s53, 1
          %s163 = scalar_lea.sflag [#allocation4], %s162
          %s164 = sand.u32 %s53, 1
          %s165 = smul.addr %s164, 8
          %s166 = scalar_lea.vmem [#allocation3], %s165
          %s168 = ssub.s32 128, 128
          %169 = vsyncadd %s163, %s168
          %s170 = smul.addr %s23, 2
          %s171 = smul.addr %s22, 2
          %s172 = sadd.s32 %s170, %s171
          %s173 = smul.addr %s172, 64
          %s174 = scalar_lea.hbm %s0, %s173
          %s176 = sshll.u32 %s166, 4
          %s177 = int_to_ptr.vmem [resolvable:$true] %s176
          %179 = dma.hbm_to_vmem [thread:$0]  %s174, 128, %s177, %s163
        $region24: #{tpu_custom_call.1} parent=19 // pred_fallthru
          _
      $region20: #{tpu_custom_call.1} parent=5 // pred_fallthru
        _
      %p180 = scmp.le.s32.totalorder 1, %s15
      %p181 = scmp.lt.s32.totalorder %s15, 3
      %p182 = pnand %p180, %p181
      %p183 = pneg %p182
      // Predicated region
      $region25: #{tpu_custom_call.1} parent=5 // pred_check
        _
      $region26: #{tpu_custom_call.1} parent=5 // pred_check_branch
        %185 = sbr.rel (%p182) target = $region28
      $region27: #{tpu_custom_call.1} parent=5 // pred_region
        %s186 = ssub.s32 %s15, 1
        %s187 = sand.u32 %s56, 1
        %s188 = scalar_lea.sflag [#allocation4], %s187
        %s189 = sand.u32 %s56, 1
        %s190 = smul.addr %s189, 8
        %s191 = scalar_lea.vmem [#allocation3], %s190
        // Predicated region
        $region29: #{tpu_custom_call.1} parent=27 // pred_check
          %p192 = pneg %p69
        $region30: #{tpu_custom_call.1} parent=27 // pred_check_branch
          %194 = sbr.rel (%p192) target = $region32
        $region31: #{tpu_custom_call.1} parent=27 // pred_region
          %195 = dma.done %s188, 128
        $region32: #{tpu_custom_call.1} parent=27 // pred_fallthru
          _
        // Predicated region
        $region33: #{tpu_custom_call.1} parent=27 // pred_check
          %p196 = pneg %p95
        $region34: #{tpu_custom_call.1} parent=27 // pred_check_branch
          %198 = sbr.rel (%p196) target = $region36
        $region35: #{tpu_custom_call.1} parent=27 // pred_region
          %199 = dma.done [#allocation7], 128
        $region36: #{tpu_custom_call.1} parent=27 // pred_fallthru
          _
        %s200 = sand.u32 %s56, 1
        %s201 = scalar_lea.sflag [#allocation4], %s200
        %s202 = sand.u32 %s56, 1
        %s203 = smul.addr %s202, 8
        %s204 = scalar_lea.vmem [#allocation3], %s203
        %p205 = pneg %p69
        %p206 = pneg %p66
        %p207 = pneg %p95
        %p208 = pneg %p92
        %p209 = pneg %p127
        %p210 = pneg %p124
        %s211 = sand.u32 %s114, 1
        %s212 = scalar_lea.sflag [#allocation5], %s211
        %s213 = sand.u32 %s114, 1
        %s214 = smul.addr %s213, 8
        %s215 = scalar_lea.vmem [#allocation8], %s214
        %s216 = sadd.s32 %s27, %s29
        %s217 = smul.u32 %s29, 128
        %s218 = sshra.s32 %s217, 7
        %s219 = sand.u32 %s217, 127
        %s220 = smul.addr %s218, 4
        %s221 = scalar_lea.vmem %s191, %s220 [#allocation3]
        %v222 = vld [vmem:[%s221] sm:$0xff]
        %223 = vst [vmem:[#allocation2] sm:$0xf] %v222
        %v225 = vcombine.high %v222, %v222
        %226 = vrot.lane.b32.xlu0 %v222, 127
        %v227 = vpop.permute.xlu0 %226
        %228 = vrot.lane.b32.xlu0 %v225, 127
        %v229 = vpop.permute.xlu0 %228
        %vm230 = vcmask 1039360
        %v231 = vsel %vm230, %v227, %v229
        %233 = vst [vmem:[#allocation2 + $0x4] sm:$0xf] %v231
        %234 = vrot.lane.b32.xlu0 %v222, 126
        %v235 = vpop.permute.xlu0 %234
        %236 = vrot.lane.b32.xlu0 %v225, 126
        %v237 = vpop.permute.xlu0 %236
        %vm238 = vcmask 1031168
        %v239 = vsel %vm238, %v235, %v237
        %241 = vst [vmem:[#allocation2 + $0x8] sm:$0xf] %v239
        %v242 = vld [vmem:[#allocation6] sm:$0xff]
        %v243 = vld [vmem:[#allocation2] sm:$0xff]
        %v244 = vld [vmem:[#allocation2 + $0x8] sm:$0xf]
        %vm245 = vcmask 97280
        %v247 = vsel %vm245, %v242, 0
        %vm249 = vcmask 1043456
        %v251 = vsel %vm249, %v244, 0
        %253 = vmatprep.subr.mxu0 0.0
        %254 = vmatpush1.msra.mxu0 0.0
        %255 = vmatprep.subr.mxu0 0.0
        %256 = vmatpush1.msra.mxu0 0.0
        %257 = vmatprep.subr.mxu0 0.0
        %258 = vmatpush1.msra.mxu0 0.0
        %259 = vmatprep.subr.mxu0 0.0
        %260 = vmatpush1.msra.mxu0 0.0
        %261 = vmatprep.subr.mxu0 0.0
        %262 = vmatpush1.msra.mxu0 0.0
        %263 = vmatprep.subr.mxu0 0.0
        %264 = vmatpush1.msra.mxu0 0.0
        %265 = vmatprep.subr.mxu0 0.0
        %266 = vmatpush1.msra.mxu0 0.0
        %267 = vmatprep.subr.mxu0 0.0
        %268 = vmatpush1.msra.mxu0 0.0
        %269 = vmatprep.subr.mxu0 0.0
        %270 = vmatpush1.msra.mxu0 0.0
        %271 = vmatprep.subr.mxu0 0.0
        %272 = vmatpush1.msra.mxu0 0.0
        %273 = vmatprep.subr.mxu0 0.0
        %274 = vmatpush1.msra.mxu0 0.0
        %275 = vmatprep.subr.mxu0 0.0
        %276 = vmatpush1.msra.mxu0 0.0
        %277 = vmatprep.subr.mxu0 0.0
        %278 = vmatpush1.msra.mxu0 0.0
        %279 = vmatprep.subr.mxu0 0.0
        %280 = vmatpush1.msra.mxu0 0.0
        %281 = vmatprep.subr.mxu0 0.0
        %282 = vmatpush1.msra.mxu0 %v251
        %283 = vmatprep.subr.mxu0 0.0
        %284 = vmatpush1.msra.mxu0 %v243
        %285 = vmatprep.subr.mxu0 0.0
        %286 = vmatpush2.msra.mxu0 0.0
        %287 = vmatprep.subr.mxu0 0.0
        %288 = vmatpush2.msra.mxu0 0.0
        %289 = vmatprep.subr.mxu0 0.0
        %290 = vmatpush2.msra.mxu0 0.0
        %291 = vmatprep.subr.mxu0 0.0
        %292 = vmatpush2.msra.mxu0 0.0
        %293 = vmatprep.subr.mxu0 0.0
        %294 = vmatpush2.msra.mxu0 0.0
        %295 = vmatprep.subr.mxu0 0.0
        %296 = vmatpush2.msra.mxu0 0.0
        %297 = vmatprep.subr.mxu0 0.0
        %298 = vmatpush2.msra.mxu0 0.0
        %299 = vmatprep.subr.mxu0 0.0
        %300 = vmatpush2.msra.mxu0 0.0
        %301 = vmatprep.subr.mxu0 0.0
        %302 = vmatpush2.msra.mxu0 0.0
        %303 = vmatprep.subr.mxu0 0.0
        %304 = vmatpush2.msra.mxu0 0.0
        %305 = vmatprep.subr.mxu0 0.0
        %306 = vmatpush2.msra.mxu0 0.0
        %307 = vmatprep.subr.mxu0 0.0
        %308 = vmatpush2.msra.mxu0 0.0
        %309 = vmatprep.subr.mxu0 0.0
        %310 = vmatpush2.msra.mxu0 0.0
        %311 = vmatprep.subr.mxu0 0.0
        %312 = vmatpush2.msra.mxu0 0.0
        %313 = vmatprep.subr.mxu0 0.0
        %314 = vmatpush2.msra.mxu0 0.0
        %315 = vmatprep.subr.mxu0 0.0
        %316 = vmatpush2.msra.mxu0 0.0
        %317 = vmatprep.mubr.f32.mxu0 0.0
        %318 = vmatmul.mubr.f32.gmra.mxu0 %v247
        %v319 = vpop.f32.mrf.mxu0
        %v320 = vadd.f32 0.0, %v319
        %v321 = vpop.f32.mrf.mxu0
        %322 = vdwg.mxu0
        %323 = vst [vmem:[%s215] sm:$0xff] %v320
        %s324 = sand.u32 %s114, 1
        %s325 = scalar_lea.sflag [#allocation5], %s324
        %s326 = sand.u32 %s114, 1
        %s327 = smul.addr %s326, 8
        %s328 = scalar_lea.vmem [#allocation8], %s327
        // Predicated region
        $region37: #{tpu_custom_call.1} parent=27 // pred_check
          %p329 = pneg %p124
        $region38: #{tpu_custom_call.1} parent=27 // pred_check_branch
          %331 = sbr.rel (%p329) target = $region40
        $region39: #{tpu_custom_call.1} parent=27 // pred_region
          %s332 = sadd.s32 %s27, %s29
          %s334 = ssub.s32 128, 128
          %335 = vsyncadd %s325, %s334
          %s336 = sadd.s32 %s332, %s28
          %s337 = sadd.s32 %s336, %s26
          %s338 = smul.addr %s337, 128
          %s339 = scalar_lea.hbm %s2, %s338
          %s341 = sshll.u32 %s328, 4
          %s342 = int_to_ptr.vmem [resolvable:$true] %s341
          %344 = dma.vmem_to_hbm [thread:$0]  %s342, 128, %s339, %s325
        $region40: #{tpu_custom_call.1} parent=27 // pred_fallthru
          _
      $region28: #{tpu_custom_call.1} parent=5 // pred_fallthru
        _
      %p345 = scmp.le.s32.totalorder 2, %s15
      // Predicated region
      $region41: #{tpu_custom_call.1} parent=5 // pred_check
        %p346 = pneg %p345
      $region42: #{tpu_custom_call.1} parent=5 // pred_check_branch
        %348 = sbr.rel (%p346) target = $region44
      $region43: #{tpu_custom_call.1} parent=5 // pred_region
        %s349 = ssub.s32 %s15, 2
        // Predicated region
        $region45: #{tpu_custom_call.1} parent=43 // pred_check
          %p350 = pneg %p130
        $region46: #{tpu_custom_call.1} parent=43 // pred_check_branch
          %352 = sbr.rel (%p350) target = $region48
        $region47: #{tpu_custom_call.1} parent=43 // pred_region
          %s353 = sand.u32 %s115, 1
          %s354 = scalar_lea.sflag [#allocation5], %s353
          %s355 = sand.u32 %s115, 1
          %s356 = smul.addr %s355, 8
          %s357 = scalar_lea.vmem [#allocation8], %s356
          %358 = dma.done %s354, 128
        $region48: #{tpu_custom_call.1} parent=43 // pred_fallthru
          _
      $region44: #{tpu_custom_call.1} parent=5 // pred_fallthru
        _
    $region6: #{tpu_custom_call.1} parent=1 // loop_footer
      %s19 = sadd.s32 1, %s15
    $region7: #{tpu_custom_call.1} parent=1 // loop_footer_branch
      %14 = sbr.rel target = $region3
    $region8: #{tpu_custom_call.1} parent=1 // loop_exit
      _
    %359 = vsyncpa [#allocation4], 1
    %s360 = scalar_lea.sflag [#allocation4], 1
    %361 = vsyncpa %s360, 1
    %362 = vsyncpa [#allocation7], 1
    %363 = vsyncpa [#allocation5], 1
    %s364 = scalar_lea.sflag [#allocation5], 1
    %365 = vsyncpa %s364, 1

</llo_original>
